<compile_context>
chip_gen: v7x
topology: tpu7x:2x2x1
jax: 0.10.0
libtpu: 0.0.40
codegen_flags: <defaults>
</compile_context>

<pallas_src>
import functools
import time

import jax
import jax.numpy as jnp
import numpy as np
from jax.experimental import pallas as pl
from jax.experimental.pallas import tpu as pltpu


# ----------------------------------------------------------------------------
# Hyper-parameter helpers (pure Python, mirrors _compute_layer_budgets)
# ----------------------------------------------------------------------------
def compute_layer_budgets(num_layers, global_budget, layer_budget_decay):
    raw = [global_budget * layer_budget_decay ** l for l in range(num_layers)]
    total = sum(raw)
    budgets = [max(128, int(r * global_budget / total)) for r in raw]
    while sum(budgets) > global_budget:
        budgets[budgets.index(max(budgets))] -= 1
    return {l: b for l, b in enumerate(budgets)}


# ----------------------------------------------------------------------------
# Pallas kernel 1: token importance scores
#   inputs : H separate (B, R, S) attention matrices (f32 source, read in place;
#            only the W window rows are staged via the BlockSpec)
#   output : (B, S) f32 raw (un-normalised) scores
#   grid   : (S // ts,)  -- 1-D, all heads folded into one block, "parallel"
# ----------------------------------------------------------------------------
def _score_kernel(*refs):
    *attn_refs, scores_ref = refs
    # One full (B, W, ts) -> (B, ts) reduce per head: no per-batch masked RMW.
    acc = jnp.sum(attn_refs[0][...].astype(jnp.float32), axis=1)
    for a in attn_refs[1:]:
        acc = acc + jnp.sum(a[...].astype(jnp.float32), axis=1)
    scores_ref[...] = acc


# Double-buffered score-kernel input budget (v7x only has 64 MiB VMEM).
_SCORE_VMEM_INPUT_BUDGET = 24 << 20


def _pick_key_tile(s, per_lane_bytes):
    """Largest key tile (multiple of 128 dividing S) that fits the VMEM budget."""
    cands = [c for c in (4096, 2048, 1024, 512, 256, 128) if c <= s and s % c == 0]
    if not cands:
        return s                                   # full last dim (lane-dense anyway)
    for c in cands:                                # descending
        if per_lane_bytes * c <= _SCORE_VMEM_INPUT_BUDGET:
            return c
    return cands[-1]


def compute_token_scores(attn_heads, window_start, window_len):
    """attn_heads: list of H (B, R, S) attention matrices; only rows
    [window_start, window_start + window_len) are staged/read."""
    H = len(attn_heads)
    B, _, S = attn_heads[0].shape
    isize = jnp.dtype(attn_heads[0].dtype).itemsize
    per_lane = 2 * H * B * window_len * isize      # double-buffered input bytes / lane
    ts = _pick_key_tile(S, per_lane)
    row_blk = window_start // window_len           # caller guarantees divisibility

    imap = lambda j: (0, row_blk, j)
    vmem_need = per_lane * ts + 2 * B * ts * 4
    vmem_limit = int(min(56 << 20, max(32 << 20, vmem_need + (8 << 20))))

    return pl.pallas_call(
        _score_kernel,
        out_shape=jax.ShapeDtypeStruct((B, S), jnp.float32),
        grid_spec=pltpu.PrefetchScalarGridSpec(
            num_scalar_prefetch=0,
            grid=(S // ts,),
            in_specs=[pl.BlockSpec((B, window_len, ts), imap) for _ in range(H)],
            out_specs=pl.BlockSpec((B, ts), lambda j: (0, j)),
        ),
        compiler_params=pltpu.CompilerParams(
            dimension_semantics=("parallel",),
            vmem_limit_bytes=vmem_limit),
    )(*attn_heads)


# ----------------------------------------------------------------------------
# Pallas kernel 2: coarsened, cross-step double-buffered row gather of K/V
#   K/V viewed as (B, S, H*D) raw HBM refs; `rows` tokens gathered per grid
#   step via outstanding manual DMAs; the NEXT step's slab is prefetched while
#   the current one is waited/stored.  keep_indices scalar-prefetched (1-D SMEM).
# ----------------------------------------------------------------------------
def _gather_kernel(idx_ref, k_hbm, v_hbm, ok_ref, ov_ref, kbuf, vbuf, sems,
                   *, rows, k_pad):
    b = pl.program_id(0)
    j = pl.program_id(1)
    n_j = pl.num_programs(1)
    slot = j & 1
    base = b * k_pad + j * rows

    # Scalar reads for the CURRENT slab -- kept ahead of every .wait().
    toks_cur = [idx_ref[base + r] for r in range(rows)]

    def start_slab(toks, s):
        for r in range(rows):
            pltpu.make_async_copy(k_hbm.at[b, pl.ds(toks[r], 1)],
                                  kbuf.at[s, pl.ds(r, 1)], sems.at[0, s, r]).start()
            pltpu.make_async_copy(v_hbm.at[b, pl.ds(toks[r], 1)],
                                  vbuf.at[s, pl.ds(r, 1)], sems.at[1, s, r]).start()

    # Prime the pipeline on the first step of every batch row.
    @pl.when(j == 0)
    def _():
        start_slab(toks_cur, 0)

    # Prefetch the NEXT slab (hides the random-row HBM latency behind this step).
    @pl.when(j + 1 < n_j)
    def _():
        nbase = base + rows
        toks_nxt = [idx_ref[nbase + r] for r in range(rows)]
        start_slab(toks_nxt, 1 - slot)

    # Wait on the current slab; descriptors rebuilt with the true sources.
    for r in range(rows):
        pltpu.make_async_copy(k_hbm.at[b, pl.ds(toks_cur[r], 1)],
                              kbuf.at[slot, pl.ds(r, 1)], sems.at[0, slot, r]).wait()
        pltpu.make_async_copy(v_hbm.at[b, pl.ds(toks_cur[r], 1)],
                              vbuf.at[slot, pl.ds(r, 1)], sems.at[1, slot, r]).wait()

    # Lane-dense (rows, H*D) stores through the pipelined output blocks.
    ok_ref[0] = kbuf[slot]
    ov_ref[0] = vbuf[slot]


def gather_kv(key_cache, value_cache, keep_indices, *, rows=16):
    B, S, H, D = key_cache.shape
    HD = H * D
    K = keep_indices.shape[1]

    k2 = key_cache.reshape(B, S, HD)
    v2 = value_cache.reshape(B, S, HD)

    # Pad K up to a multiple of `rows` (repeat last index); slice back afterwards.
    k_pad = int(rows * pl.cdiv(K, rows))
    idx = keep_indices.astype(jnp.int32)
    if k_pad != K:
        pad = jnp.broadcast_to(idx[:, -1:], (B, k_pad - K))
        idx = jnp.concatenate([idx, pad], axis=1)
    idx_flat = idx.reshape(B * k_pad)          # 1-D: avoids 2-D SMEM padding blow-up

    kernel = functools.partial(_gather_kernel, rows=rows, k_pad=k_pad)
    out_spec = pl.BlockSpec((1, rows, HD), lambda b, j, idx: (b, j, 0))

    out_k, out_v = pl.pallas_call(
        kernel,
        out_shape=(jax.ShapeDtypeStruct((B, k_pad, HD), key_cache.dtype),
                   jax.ShapeDtypeStruct((B, k_pad, HD), value_cache.dtype)),
        grid_spec=pltpu.PrefetchScalarGridSpec(
            num_scalar_prefetch=1,
            grid=(B, k_pad // rows),
            in_specs=[pl.BlockSpec(memory_space=pl.ANY),
                      pl.BlockSpec(memory_space=pl.ANY)],
            out_specs=[out_spec, out_spec],
            scratch_shapes=[pltpu.VMEM((2, rows, HD), key_cache.dtype),
                            pltpu.VMEM((2, rows, HD), value_cache.dtype),
                            pltpu.SemaphoreType.DMA((2, 2, rows))]),
        compiler_params=pltpu.CompilerParams(
            dimension_semantics=("parallel", "arbitrary")),
    )(idx_flat, k2, v2)

    out_k = out_k[:, :K, :].reshape(B, K, H, D)
    out_v = out_v[:, :K, :].reshape(B, K, H, D)
    return out_k, out_v


# ----------------------------------------------------------------------------
# Glue: normalization + top-k selection + ascending index sort (plain JAX)
# TODO(synk): top-k + index sort kept in plain JAX (no clean Pallas sort on TPU).
# ----------------------------------------------------------------------------
def normalize_scores(scores):
    # Single GLOBAL max over (B, S): matches torch `scores.max()` (no dim) exactly.
    m = jnp.max(scores)
    return jnp.where(m > 0, scores / m, scores)


def topk_keep_indices(scores, layer_budget):
    k = min(layer_budget, scores.shape[1])
    _, idx = jax.lax.top_k(scores, k)                    # descending by score
    return jnp.sort(idx, axis=1).astype(jnp.int32)       # ascending positions


# ----------------------------------------------------------------------------
# DynamicKVCompressor forward (update path), Pallas-backed
# ----------------------------------------------------------------------------
class DynamicKVCompressorPallas:
    def __init__(self, num_layers, num_heads, head_dim, global_budget=2048,
                 layer_budget_decay=0.9, token_scoring_window=128,
                 update_interval=256):
        self.num_layers = num_layers
        self.num_heads = num_heads
        self.head_dim = head_dim
        self.global_budget = global_budget
        self.layer_budget_decay = layer_budget_decay
        self.token_scoring_window = token_scoring_window
        self.update_interval = update_interval
        self.layer_budgets = compute_layer_budgets(
            num_layers, global_budget, layer_budget_decay)
        self.token_positions = None
        self.steps_since_last_update = 0
        self.stats = {'update_count': 0, 'avg_update_time': 0,
                      'avg_tokens_removed': 0, 'compression_ratio': 0}

    def _layer_scores(self, attention_matrices, layer, batch_size, seq_len):
        lb = max(0, seq_len - self.token_scoring_window)
        heads = [h for h in range(self.num_heads)
                 if (layer, h) in attention_matrices]
        if not heads:
            return jnp.zeros((batch_size, seq_len), jnp.float32)
        attn_heads = [attention_matrices[(layer, h)] for h in heads]
        w_eff = seq_len - lb
        # Primary path: read the f32 source directly; the BlockSpec stages only
        # the window rows (no slice/cast/stack HBM pass).  Requires the window
        # start to be block-aligned; otherwise fall back to a cheap JAX slice.
        aligned = (lb == 0) or (lb % w_eff == 0 and w_eff % 8 == 0)
        if not aligned:
            attn_heads = [a[:, lb:seq_len, :] for a in attn_heads]
            lb = 0
        return compute_token_scores(attn_heads, window_start=lb, window_len=w_eff)

    def forward(self, key_cache, value_cache, attention_matrices=None,
                do_update=False):
        seq_len = next(iter(key_cache.values())).shape[1]
        batch_size = next(iter(key_cache.values())).shape[0]
        self.steps_since_last_update += 1
        if self.token_positions is None:
            pos = jnp.broadcast_to(jnp.arange(seq_len, dtype=jnp.int32)[None, :],
                                   (batch_size, seq_len))
            self.token_positions = {l: pos for l in range(self.num_layers)}

        should_update = do_update or \
            self.steps_since_last_update >= self.update_interval
        if not should_update or attention_matrices is None:
            return key_cache, value_cache, self.stats

        self.steps_since_last_update = 0
        start_time = time.time()
        total_tokens_removed = 0
        compressed_key_cache = {}
        compressed_value_cache = {}

        for layer in range(self.num_layers):
            if layer not in key_cache:
                continue
            raw_scores = self._layer_scores(attention_matrices, layer,
                                            batch_size, seq_len)
            token_scores = normalize_scores(raw_scores)   # hoisted out of kernel
            keep_indices = topk_keep_indices(token_scores,
                                             self.layer_budgets[layer])
            comp_k, comp_v = gather_kv(key_cache[layer], value_cache[layer],
                                       keep_indices)

            self.token_positions[layer] = jnp.take_along_axis(
                self.token_positions[layer], keep_indices, axis=1)
            compressed_key_cache[layer] = comp_k
            compressed_value_cache[layer] = comp_v
            total_tokens_removed += seq_len - comp_k.shape[1]

        elapsed = time.time() - start_time
        avg_removed = total_tokens_removed / len(key_cache)
        # NOTE: formula mirrors the PyTorch spec exactly (incl. its double divide).
        compression_ratio = seq_len / (seq_len - avg_removed / len(key_cache))
        self.stats['update_count'] += 1
        c = self.stats['update_count']
        self.stats['avg_update_time'] = \
            (self.stats['avg_update_time'] * (c - 1) + elapsed) / c
        self.stats['avg_tokens_removed'] = \
            (self.stats['avg_tokens_removed'] * (c - 1) + avg_removed) / c
        self.stats['compression_ratio'] = compression_ratio
        return compressed_key_cache, compressed_value_cache, self.stats


# ----------------------------------------------------------------------------
# Demo + correctness check
# ----------------------------------------------------------------------------
if __name__ == "__main__":
    num_layers, num_heads, head_dim = 2, 4, 32        # H*D = 128 -> lane-dense gather
    batch, seq_len = 2, 256
    global_budget, window = 256, 128                  # budgets -> {0: 128, 1: 128}

    key = jax.random.PRNGKey(0)
    kk, kv, ka = jax.random.split(key, 3)

    key_cache = {}
    value_cache = {}
    attention_matrices = {}
    for layer in range(num_layers):
        kk, k1 = jax.random.split(kk)
        kv, k2 = jax.random.split(kv)
        key_cache[layer] = jax.random.normal(
            k1, (batch, seq_len, num_heads, head_dim), jnp.float32)
        value_cache[layer] = jax.random.normal(
            k2, (batch, seq_len, num_heads, head_dim), jnp.float32)
        for h in range(num_heads):
            ka, k3 = jax.random.split(ka)
            logits = jax.random.normal(k3, (batch, seq_len, seq_len), jnp.float32)
            attention_matrices[(layer, h)] = jax.nn.softmax(logits, axis=-1)

    compressor = DynamicKVCompressorPallas(
        num_layers=num_layers, num_heads=num_heads, head_dim=head_dim,
        global_budget=global_budget, token_scoring_window=window)

    ck, cv, stats = compressor.forward(
        key_cache, value_cache, attention_matrices, do_update=True)
    jax.block_until_ready([ck[l] for l in ck] + [cv[l] for l in cv])

    # ---- correctness check (plain-JAX / numpy reference) -------------------
    ok = True
    lb = max(0, seq_len - window)
    for layer in range(num_layers):
        # Scores via the exact path forward() uses.
        pall_scores = compressor._layer_scores(attention_matrices, layer,
                                               batch, seq_len)
        ref_scores = sum(
            jnp.sum(attention_matrices[(layer, h)][:, lb:seq_len, :], axis=1)
            for h in range(num_heads))
        if not np.allclose(np.asarray(pall_scores), np.asarray(ref_scores),
                           rtol=1e-5, atol=1e-5):
            ok = False

        # Reproduce the exact index path used by forward() for the gather check.
        keep_idx = np.asarray(
            topk_keep_indices(normalize_scores(pall_scores),
                              compressor.layer_budgets[layer]))
        ref_k = np.take_along_axis(np.asarray(key_cache[layer]),
                                   keep_idx[:, :, None, None], axis=1)
        ref_v = np.take_along_axis(np.asarray(value_cache[layer]),
                                   keep_idx[:, :, None, None], axis=1)
        if not np.array_equal(np.asarray(ck[layer]), ref_k):
            ok = False
        if not np.array_equal(np.asarray(cv[layer]), ref_v):
            ok = False

    assert ok, "Pallas kernel output does not match reference"
    assert ck[0].shape == (batch, 128, num_heads, head_dim)
    print("KERNEL_OK")
</pallas_src>

<mosaic_0001>
module attributes {stable_mosaic.version = 11 : i64} {
  func.func @_score_kernel(%arg0: i32, %arg1: memref<2x128x256xf32, #tpu.memory_space<vmem>>, %arg2: memref<2x128x256xf32, #tpu.memory_space<vmem>>, %arg3: memref<2x128x256xf32, #tpu.memory_space<vmem>>, %arg4: memref<2x128x256xf32, #tpu.memory_space<vmem>>, %arg5: memref<2x256xf32, #tpu.memory_space<vmem>>) attributes {dimension_semantics = [#tpu.dimension_semantics<parallel>], iteration_bounds = array<i64: 1>, scalar_prefetch = 0 : i64, scratch_operands = 0 : i64, tpu.core_type = #tpu.core_type<tc>, window_params = [{transform_indices = @transform_0, window_bounds = array<i64: 2, 128, 256>}, {transform_indices = @transform_1, window_bounds = array<i64: 2, 128, 256>}, {transform_indices = @transform_2, window_bounds = array<i64: 2, 128, 256>}, {transform_indices = @transform_3, window_bounds = array<i64: 2, 128, 256>}, {transform_indices = @transform_4, window_bounds = array<i64: 2, 256>}]} {
    %c0 = arith.constant 0 : index
    %c0_0 = arith.constant 0 : index
    %c0_1 = arith.constant 0 : index
    %0 = vector.load %arg1[%c0, %c0_0, %c0_1] : memref<2x128x256xf32, #tpu.memory_space<vmem>>, vector<2x128x256xf32>
    %cst = arith.constant dense<0.000000e+00> : vector<2x256xf32>
    %1 = vector.multi_reduction <add>, %0, %cst [1] : vector<2x128x256xf32> to vector<2x256xf32>
    %c0_2 = arith.constant 0 : index
    %c0_3 = arith.constant 0 : index
    %c0_4 = arith.constant 0 : index
    %2 = vector.load %arg2[%c0_2, %c0_3, %c0_4] : memref<2x128x256xf32, #tpu.memory_space<vmem>>, vector<2x128x256xf32>
    %cst_5 = arith.constant dense<0.000000e+00> : vector<2x256xf32>
    %3 = vector.multi_reduction <add>, %2, %cst_5 [1] : vector<2x128x256xf32> to vector<2x256xf32>
    %4 = arith.addf %1, %3 : vector<2x256xf32>
    %c0_6 = arith.constant 0 : index
    %c0_7 = arith.constant 0 : index
    %c0_8 = arith.constant 0 : index
    %5 = vector.load %arg3[%c0_6, %c0_7, %c0_8] : memref<2x128x256xf32, #tpu.memory_space<vmem>>, vector<2x128x256xf32>
    %cst_9 = arith.constant dense<0.000000e+00> : vector<2x256xf32>
    %6 = vector.multi_reduction <add>, %5, %cst_9 [1] : vector<2x128x256xf32> to vector<2x256xf32>
    %7 = arith.addf %4, %6 : vector<2x256xf32>
    %c0_10 = arith.constant 0 : index
    %c0_11 = arith.constant 0 : index
    %c0_12 = arith.constant 0 : index
    %8 = vector.load %arg4[%c0_10, %c0_11, %c0_12] : memref<2x128x256xf32, #tpu.memory_space<vmem>>, vector<2x128x256xf32>
    %cst_13 = arith.constant dense<0.000000e+00> : vector<2x256xf32>
    %9 = vector.multi_reduction <add>, %8, %cst_13 [1] : vector<2x128x256xf32> to vector<2x256xf32>
    %10 = arith.addf %7, %9 : vector<2x256xf32>
    %c0_14 = arith.constant 0 : index
    %c0_15 = arith.constant 0 : index
    %11 = vector.load %arg5[%c0_14, %c0_15] : memref<2x256xf32, #tpu.memory_space<vmem>>, vector<2x256xf32>
    tpu.vector_store %arg5[%c0_14, %c0_15], %10 {strides = array<i32>} : memref<2x256xf32, #tpu.memory_space<vmem>>, vector<2x256xf32>,
    return
  }
  func.func @transform_0(%arg0: i32) -> (i32, i32, i32) {
    %c0_i32 = arith.constant 0 : i32
    %c1_i32 = arith.constant 1 : i32
    %c0_i32_0 = arith.constant 0 : i32
    return %c0_i32, %c1_i32, %arg0 : i32, i32, i32
  }
  func.func @transform_1(%arg0: i32) -> (i32, i32, i32) {
    %c0_i32 = arith.constant 0 : i32
    %c1_i32 = arith.constant 1 : i32
    %c0_i32_0 = arith.constant 0 : i32
    return %c0_i32, %c1_i32, %arg0 : i32, i32, i32
  }
  func.func @transform_2(%arg0: i32) -> (i32, i32, i32) {
    %c0_i32 = arith.constant 0 : i32
    %c1_i32 = arith.constant 1 : i32
    %c0_i32_0 = arith.constant 0 : i32
    return %c0_i32, %c1_i32, %arg0 : i32, i32, i32
  }
  func.func @transform_3(%arg0: i32) -> (i32, i32, i32) {
    %c0_i32 = arith.constant 0 : i32
    %c1_i32 = arith.constant 1 : i32
    %c0_i32_0 = arith.constant 0 : i32
    return %c0_i32, %c1_i32, %arg0 : i32, i32, i32
  }
  func.func @transform_4(%arg0: i32) -> (i32, i32) {
    %c0_i32 = arith.constant 0 : i32
    %c0_i32_0 = arith.constant 0 : i32
    return %c0_i32, %arg0 : i32, i32
  }
}

</mosaic_0001>

<llo_original>
// kernel: tpu_custom_call.1
$region0: #{tpu_custom_call.1}
  #allocation0 [shape = 'u32[]', space=smem, size = 0x4, offset = 0x4, fixed_abs, tag = 'smem constant byte address 0x4 - core index']
  #allocation1 [shape = 'u32[144,128]{1,0:T(1,128)}', space=vmem, size = 0x12000, scoped, tag = 'internal scratch']
  #allocation11 [shape = 's32[]', space=sflag, size = 0x4, offset = 0, fixed_abs, tag = 'sflag constant byte address 0x0 - dummy sync flag']
  #allocation13 [shape = 's32[]', space=sflag, size = 0x4, offset = 0, fixed_abs, tag = 'sflag constant byte address 0x0 - dummy sync flag']
  #allocation15 [shape = 's32[]', space=sflag, size = 0x4, offset = 0, fixed_abs, tag = 'sflag constant byte address 0x0 - dummy sync flag']
  #allocation17 [shape = 's32[]', space=sflag, size = 0x4, offset = 0, fixed_abs, tag = 'sflag constant byte address 0x0 - dummy sync flag']
  %s0 = inlined_call_operand.hbm [shape: f32[2,256,256], index: 0, kind: input, shape index: {}]
  %s1 = inlined_call_operand.hbm [shape: f32[2,256,256], index: 1, kind: input, shape index: {}]
  %s2 = inlined_call_operand.hbm [shape: f32[2,256,256], index: 2, kind: input, shape index: {}]
  %s3 = inlined_call_operand.hbm [shape: f32[2,256,256], index: 3, kind: input, shape index: {}]
  %s4 = inlined_call_operand.hbm [shape: f32[2,256], index: 4, kind: output, shape index: {}]
  %s5 = sld [smem:[#allocation0]]
  $region42: #{tpu_custom_call.1} parent=0
    _
  %s7 = ssub.s32 1, %s5
  %s8 = scalar_select 0, %s7, %s5
  $region1: #{tpu_custom_call.1} parent=0
    #allocation2 [shape = 'u8[262144]{0}', space=vmem, size = 0x40000, scoped, tag = 'input window, operand 0, single buffered']
    #allocation3 [shape = 's32[1]{0}', space=sflag, size = 0x4, scoped, tag = 'scoped memory for tpu_custom_call.1']
    #allocation4 [shape = 's32[1]{0}', space=sflag, size = 0x4, scoped, tag = 'scoped memory for tpu_custom_call.1']
    #allocation5 [shape = 'u8[262144]{0}', space=vmem, size = 0x40000, scoped, tag = 'input window, operand 1, single buffered']
    #allocation6 [shape = 's32[1]{0}', space=sflag, size = 0x4, scoped, tag = 'scoped memory for tpu_custom_call.1']
    #allocation7 [shape = 'u8[262144]{0}', space=vmem, size = 0x40000, scoped, tag = 'input window, operand 2, single buffered']
    #allocation8 [shape = 'u8[262144]{0}', space=vmem, size = 0x40000, scoped, tag = 'input window, operand 3, single buffered']
    #allocation9 [shape = 's32[1]{0}', space=sflag, size = 0x4, scoped, tag = 'scoped memory for tpu_custom_call.1']
    #allocation10 [shape = 'u8[2048]{0}', space=vmem, size = 0x800, scoped, tag = 'output window, operand 0, single buffered']
    %9 = vsyncpa [#allocation3], 0
    %10 = vsyncpa [#allocation6], 0
    %11 = vsyncpa [#allocation9], 0
    %12 = vsyncpa [#allocation4], 0
    // Predicated region
    $region2: #{tpu_custom_call.1} parent=1 // pred_check
      _
    $region3: #{tpu_custom_call.1} parent=1 // pred_check_branch
      %14 = sbr.rel (0) target = $region5
    $region4: #{tpu_custom_call.1} parent=1 // pred_region
      #allocation12 [shape = 'u32[6]{0}', space=smem, size = 0x18, scoped, tag = 'DMA stride descriptor']
      %s16 = ssub.s32 8192, 8192
      %17 = vsyncadd [#allocation3], %s16
      %s18 = scalar_lea.hbm %s0, 4096
      %s20 = sshll.u32 1, 14
      %s21 = sxor.u32 4294967295, %s20
      %s23 = sld [smem:[#allocation0]]
      %s24 = sadd.s32 2, %s23
      %s26 = sshll.u32 7, 26
      %s27 = sxor.u32 4294967295, %s26
      %s28 = sand.u32 0, %s27
      %s29 = sshll.u32 %s24, 26
      %s30 = sor.u32 %s28, %s29
      %s31 = sshll.u32 [#allocation2], 4
      %s32 = int_to_ptr.vmem [resolvable:$true] %s31
      %38 = sst [smem:[#allocation12]] 8192
      %s39 = scalar_lea.smem [#allocation12], 1
      %40 = sst [smem:[%s39]] 4096
      %s41 = scalar_lea.smem [#allocation12], 2
      %42 = sst [smem:[%s41]] 16
      %s43 = scalar_lea.smem [#allocation12], 3
      %44 = sst [smem:[%s43]] 256
      %s45 = scalar_lea.smem [#allocation12], 4
      %46 = sst [smem:[%s45]] 256
      %s47 = scalar_lea.smem [#allocation12], 5
      %48 = sst [smem:[%s47]] 16
      %50 = dma.general %s18, 8192, %s32, [#allocation3], [#allocation11], [#allocation12], %s30, 0
    $region5: #{tpu_custom_call.1} parent=1 // pred_fallthru
      _
    // Predicated region
    $region6: #{tpu_custom_call.1} parent=1 // pred_check
      _
    $region7: #{tpu_custom_call.1} parent=1 // pred_check_branch
      %52 = sbr.rel (0) target = $region9
    $region8: #{tpu_custom_call.1} parent=1 // pred_region
      #allocation14 [shape = 'u32[6]{0}', space=smem, size = 0x18, scoped, tag = 'DMA stride descriptor']
      %s54 = ssub.s32 8192, 8192
      %55 = vsyncadd [#allocation6], %s54
      %s56 = scalar_lea.hbm %s1, 4096
      %s58 = sshll.u32 1, 14
      %s59 = sxor.u32 4294967295, %s58
      %s61 = sld [smem:[#allocation0]]
      %s62 = sadd.s32 2, %s61
      %s64 = sshll.u32 7, 26
      %s65 = sxor.u32 4294967295, %s64
      %s66 = sand.u32 0, %s65
      %s67 = sshll.u32 %s62, 26
      %s68 = sor.u32 %s66, %s67
      %s69 = sshll.u32 [#allocation5], 4
      %s70 = int_to_ptr.vmem [resolvable:$true] %s69
      %76 = sst [smem:[#allocation14]] 8192
      %s77 = scalar_lea.smem [#allocation14], 1
      %78 = sst [smem:[%s77]] 4096
      %s79 = scalar_lea.smem [#allocation14], 2
      %80 = sst [smem:[%s79]] 16
      %s81 = scalar_lea.smem [#allocation14], 3
      %82 = sst [smem:[%s81]] 256
      %s83 = scalar_lea.smem [#allocation14], 4
      %84 = sst [smem:[%s83]] 256
      %s85 = scalar_lea.smem [#allocation14], 5
      %86 = sst [smem:[%s85]] 16
      %88 = dma.general %s56, 8192, %s70, [#allocation6], [#allocation13], [#allocation14], %s68, 0
    $region9: #{tpu_custom_call.1} parent=1 // pred_fallthru
      _
    // Predicated region
    $region10: #{tpu_custom_call.1} parent=1 // pred_check
      _
    $region11: #{tpu_custom_call.1} parent=1 // pred_check_branch
      %90 = sbr.rel (0) target = $region13
    $region12: #{tpu_custom_call.1} parent=1 // pred_region
      #allocation16 [shape = 'u32[6]{0}', space=smem, size = 0x18, scoped, tag = 'DMA stride descriptor']
      %s92 = ssub.s32 8192, 8192
      %93 = vsyncadd [#allocation6], %s92
      %s94 = scalar_lea.hbm %s2, 4096
      %s96 = sshll.u32 1, 14
      %s97 = sxor.u32 4294967295, %s96
      %s99 = sld [smem:[#allocation0]]
      %s100 = sadd.s32 2, %s99
      %s102 = sshll.u32 7, 26
      %s103 = sxor.u32 4294967295, %s102
      %s104 = sand.u32 0, %s103
      %s105 = sshll.u32 %s100, 26
      %s106 = sor.u32 %s104, %s105
      %s107 = sshll.u32 [#allocation7], 4
      %s108 = int_to_ptr.vmem [resolvable:$true] %s107
      %114 = sst [smem:[#allocation16]] 8192
      %s115 = scalar_lea.smem [#allocation16], 1
      %116 = sst [smem:[%s115]] 4096
      %s117 = scalar_lea.smem [#allocation16], 2
      %118 = sst [smem:[%s117]] 16
      %s119 = scalar_lea.smem [#allocation16], 3
      %120 = sst [smem:[%s119]] 256
      %s121 = scalar_lea.smem [#allocation16], 4
      %122 = sst [smem:[%s121]] 256
      %s123 = scalar_lea.smem [#allocation16], 5
      %124 = sst [smem:[%s123]] 16
      %126 = dma.general %s94, 8192, %s108, [#allocation6], [#allocation15], [#allocation16], %s106, 0
    $region13: #{tpu_custom_call.1} parent=1 // pred_fallthru
      _
    // Predicated region
    $region14: #{tpu_custom_call.1} parent=1 // pred_check
      _
    $region15: #{tpu_custom_call.1} parent=1 // pred_check_branch
      %128 = sbr.rel (0) target = $region17
    $region16: #{tpu_custom_call.1} parent=1 // pred_region
      #allocation18 [shape = 'u32[6]{0}', space=smem, size = 0x18, scoped, tag = 'DMA stride descriptor']
      %s130 = ssub.s32 8192, 8192
      %131 = vsyncadd [#allocation9], %s130
      %s132 = scalar_lea.hbm %s3, 4096
      %s134 = sshll.u32 1, 14
      %s135 = sxor.u32 4294967295, %s134
      %s137 = sld [smem:[#allocation0]]
      %s138 = sadd.s32 2, %s137
      %s140 = sshll.u32 7, 26
      %s141 = sxor.u32 4294967295, %s140
      %s142 = sand.u32 0, %s141
      %s143 = sshll.u32 %s138, 26
      %s144 = sor.u32 %s142, %s143
      %s145 = sshll.u32 [#allocation8], 4
      %s146 = int_to_ptr.vmem [resolvable:$true] %s145
      %152 = sst [smem:[#allocation18]] 8192
      %s153 = scalar_lea.smem [#allocation18], 1
      %154 = sst [smem:[%s153]] 4096
      %s155 = scalar_lea.smem [#allocation18], 2
      %156 = sst [smem:[%s155]] 16
      %s157 = scalar_lea.smem [#allocation18], 3
      %158 = sst [smem:[%s157]] 256
      %s159 = scalar_lea.smem [#allocation18], 4
      %160 = sst [smem:[%s159]] 256
      %s161 = scalar_lea.smem [#allocation18], 5
      %162 = sst [smem:[%s161]] 16
      %164 = dma.general %s132, 8192, %s146, [#allocation9], [#allocation17], [#allocation18], %s144, 0
    $region17: #{tpu_custom_call.1} parent=1 // pred_fallthru
      _
    // Predicated region
    $region18: #{tpu_custom_call.1} parent=1 // pred_check
      _
    $region19: #{tpu_custom_call.1} parent=1 // pred_check_branch
      %166 = sbr.rel (0) target = $region21
    $region20: #{tpu_custom_call.1} parent=1 // pred_region
      %167 = dma.done [#allocation3], 8192
    $region21: #{tpu_custom_call.1} parent=1 // pred_fallthru
      _
    // Predicated region
    $region22: #{tpu_custom_call.1} parent=1 // pred_check
      _
    $region23: #{tpu_custom_call.1} parent=1 // pred_check_branch
      %169 = sbr.rel (0) target = $region25
    $region24: #{tpu_custom_call.1} parent=1 // pred_region
      %170 = dma.done [#allocation6], 8192
    $region25: #{tpu_custom_call.1} parent=1 // pred_fallthru
      _
    // Predicated region
    $region26: #{tpu_custom_call.1} parent=1 // pred_check
      _
    $region27: #{tpu_custom_call.1} parent=1 // pred_check_branch
      %172 = sbr.rel (0) target = $region29
    $region28: #{tpu_custom_call.1} parent=1 // pred_region
      %173 = dma.done [#allocation6], 8192
    $region29: #{tpu_custom_call.1} parent=1 // pred_fallthru
      _
    // Predicated region
    $region30: #{tpu_custom_call.1} parent=1 // pred_check
      _
    $region31: #{tpu_custom_call.1} parent=1 // pred_check_branch
      %175 = sbr.rel (0) target = $region33
    $region32: #{tpu_custom_call.1} parent=1 // pred_region
      %176 = dma.done [#allocation9], 8192
    $region33: #{tpu_custom_call.1} parent=1 // pred_fallthru
      _
    %v177 = vld [vmem:[#allocation2] sm:$0xff]
    %v178 = vld [vmem:[#allocation2 + $0x8] sm:$0xff]
    %v179 = vld [vmem:[#allocation2 + $0x10] sm:$0xff]
    %v180 = vld [vmem:[#allocation2 + $0x18] sm:$0xff]
    %v181 = vld [vmem:[#allocation2 + $0x20] sm:$0xff]
    %v182 = vld [vmem:[#allocation2 + $0x28] sm:$0xff]
    %v183 = vld [vmem:[#allocation2 + $0x30] sm:$0xff]
    %v184 = vld [vmem:[#allocation2 + $0x38] sm:$0xff]
    %v185 = vld [vmem:[#allocation2 + $0x40] sm:$0xff]
    %v186 = vld [vmem:[#allocation2 + $0x48] sm:$0xff]
    %v187 = vld [vmem:[#allocation2 + $0x50] sm:$0xff]
    %v188 = vld [vmem:[#allocation2 + $0x58] sm:$0xff]
    %v189 = vld [vmem:[#allocation2 + $0x60] sm:$0xff]
    %v190 = vld [vmem:[#allocation2 + $0x68] sm:$0xff]
    %v191 = vld [vmem:[#allocation2 + $0x70] sm:$0xff]
    %v192 = vld [vmem:[#allocation2 + $0x78] sm:$0xff]
    %v193 = vld [vmem:[#allocation2 + $0x80] sm:$0xff]
    %v194 = vld [vmem:[#allocation2 + $0x88] sm:$0xff]
    %v195 = vld [vmem:[#allocation2 + $0x90] sm:$0xff]
    %v196 = vld [vmem:[#allocation2 + $0x98] sm:$0xff]
    %v197 = vld [vmem:[#allocation2 + $0xa0] sm:$0xff]
    %v198 = vld [vmem:[#allocation2 + $0xa8] sm:$0xff]
    %v199 = vld [vmem:[#allocation2 + $0xb0] sm:$0xff]
    %v200 = vld [vmem:[#allocation2 + $0xb8] sm:$0xff]
    %v201 = vld [vmem:[#allocation2 + $0xc0] sm:$0xff]
    %v202 = vld [vmem:[#allocation2 + $0xc8] sm:$0xff]
    %v203 = vld [vmem:[#allocation2 + $0xd0] sm:$0xff]
    %v204 = vld [vmem:[#allocation2 + $0xd8] sm:$0xff]
    %v205 = vld [vmem:[#allocation2 + $0xe0] sm:$0xff]
    %v206 = vld [vmem:[#allocation2 + $0xe8] sm:$0xff]
    %v207 = vld [vmem:[#allocation2 + $0xf0] sm:$0xff]
    %v208 = vld [vmem:[#allocation2 + $0xf8] sm:$0xff]
    %v209 = vld [vmem:[#allocation2 + $0x100] sm:$0xff]
    %v210 = vld [vmem:[#allocation2 + $0x108] sm:$0xff]
    %v211 = vld [vmem:[#allocation2 + $0x110] sm:$0xff]
    %v212 = vld [vmem:[#allocation2 + $0x118] sm:$0xff]
    %v213 = vld [vmem:[#allocation2 + $0x120] sm:$0xff]
    %v214 = vld [vmem:[#allocation2 + $0x128] sm:$0xff]
    %v215 = vld [vmem:[#allocation2 + $0x130] sm:$0xff]
    %v216 = vld [vmem:[#allocation2 + $0x138] sm:$0xff]
    %v217 = vld [vmem:[#allocation2 + $0x140] sm:$0xff]
    %v218 = vld [vmem:[#allocation2 + $0x148] sm:$0xff]
    %v219 = vld [vmem:[#allocation2 + $0x150] sm:$0xff]
    %v220 = vld [vmem:[#allocation2 + $0x158] sm:$0xff]
    %v221 = vld [vmem:[#allocation2 + $0x160] sm:$0xff]
    %v222 = vld [vmem:[#allocation2 + $0x168] sm:$0xff]
    %v223 = vld [vmem:[#allocation2 + $0x170] sm:$0xff]
    %v224 = vld [vmem:[#allocation2 + $0x178] sm:$0xff]
    %v225 = vld [vmem:[#allocation2 + $0x180] sm:$0xff]
    %v226 = vld [vmem:[#allocation2 + $0x188] sm:$0xff]
    %v227 = vld [vmem:[#allocation2 + $0x190] sm:$0xff]
    %v228 = vld [vmem:[#allocation2 + $0x198] sm:$0xff]
    %v229 = vld [vmem:[#allocation2 + $0x1a0] sm:$0xff]
    %v230 = vld [vmem:[#allocation2 + $0x1a8] sm:$0xff]
    %v231 = vld [vmem:[#allocation2 + $0x1b0] sm:$0xff]
    %v232 = vld [vmem:[#allocation2 + $0x1b8] sm:$0xff]
    %v233 = vld [vmem:[#allocation2 + $0x1c0] sm:$0xff]
    %v234 = vld [vmem:[#allocation2 + $0x1c8] sm:$0xff]
    %v235 = vld [vmem:[#allocation2 + $0x1d0] sm:$0xff]
    %v236 = vld [vmem:[#allocation2 + $0x1d8] sm:$0xff]
    %v237 = vld [vmem:[#allocation2 + $0x1e0] sm:$0xff]
    %v238 = vld [vmem:[#allocation2 + $0x1e8] sm:$0xff]
    %v239 = vld [vmem:[#allocation2 + $0x1f0] sm:$0xff]
    %v240 = vld [vmem:[#allocation2 + $0x1f8] sm:$0xff]
    %v241 = vadd.f32 %v177, %v179
    %v242 = vadd.f32 %v241, %v181
    %v243 = vadd.f32 %v242, %v183
    %v244 = vadd.f32 %v243, %v185
    %v245 = vadd.f32 %v244, %v187
    %v246 = vadd.f32 %v245, %v189
    %v247 = vadd.f32 %v246, %v191
    %v248 = vadd.f32 %v247, %v193
    %v249 = vadd.f32 %v248, %v195
    %v250 = vadd.f32 %v249, %v197
    %v251 = vadd.f32 %v250, %v199
    %v252 = vadd.f32 %v251, %v201
    %v253 = vadd.f32 %v252, %v203
    %v254 = vadd.f32 %v253, %v205
    %v255 = vadd.f32 %v254, %v207
    %v256 = vrot.slane %v255, 4
    %v257 = vadd.f32 %v255, %v256
    %v258 = vrot.slane %v257, 2
    %v259 = vadd.f32 %v257, %v258
    %v260 = vrot.slane %v259, 1
    %v261 = vadd.f32 %v259, %v260
    %v262 = vadd.f32 %v178, %v180
    %v263 = vadd.f32 %v262, %v182
    %v264 = vadd.f32 %v263, %v184
    %v265 = vadd.f32 %v264, %v186
    %v266 = vadd.f32 %v265, %v188
    %v267 = vadd.f32 %v266, %v190
    %v268 = vadd.f32 %v267, %v192
    %v269 = vadd.f32 %v268, %v194
    %v270 = vadd.f32 %v269, %v196
    %v271 = vadd.f32 %v270, %v198
    %v272 = vadd.f32 %v271, %v200
    %v273 = vadd.f32 %v272, %v202
    %v274 = vadd.f32 %v273, %v204
    %v275 = vadd.f32 %v274, %v206
    %v276 = vadd.f32 %v275, %v208
    %v277 = vrot.slane %v276, 4
    %v278 = vadd.f32 %v276, %v277
    %v279 = vrot.slane %v278, 2
    %v280 = vadd.f32 %v278, %v279
    %v281 = vrot.slane %v280, 1
    %v282 = vadd.f32 %v280, %v281
    %v283 = vadd.f32 %v209, %v211
    %v284 = vadd.f32 %v283, %v213
    %v285 = vadd.f32 %v284, %v215
    %v286 = vadd.f32 %v285, %v217
    %v287 = vadd.f32 %v286, %v219
    %v288 = vadd.f32 %v287, %v221
    %v289 = vadd.f32 %v288, %v223
    %v290 = vadd.f32 %v289, %v225
    %v291 = vadd.f32 %v290, %v227
    %v292 = vadd.f32 %v291, %v229
    %v293 = vadd.f32 %v292, %v231
    %v294 = vadd.f32 %v293, %v233
    %v295 = vadd.f32 %v294, %v235
    %v296 = vadd.f32 %v295, %v237
    %v297 = vadd.f32 %v296, %v239
    %v298 = vrot.slane %v297, 4
    %v299 = vadd.f32 %v297, %v298
    %v300 = vrot.slane %v299, 2
    %v301 = vadd.f32 %v299, %v300
    %v302 = vrot.slane %v301, 1
    %v303 = vadd.f32 %v301, %v302
    %v304 = vadd.f32 %v210, %v212
    %v305 = vadd.f32 %v304, %v214
    %v306 = vadd.f32 %v305, %v216
    %v307 = vadd.f32 %v306, %v218
    %v308 = vadd.f32 %v307, %v220
    %v309 = vadd.f32 %v308, %v222
    %v310 = vadd.f32 %v309, %v224
    %v311 = vadd.f32 %v310, %v226
    %v312 = vadd.f32 %v311, %v228
    %v313 = vadd.f32 %v312, %v230
    %v314 = vadd.f32 %v313, %v232
    %v315 = vadd.f32 %v314, %v234
    %v316 = vadd.f32 %v315, %v236
    %v317 = vadd.f32 %v316, %v238
    %v318 = vadd.f32 %v317, %v240
    %v319 = vrot.slane %v318, 4
    %v320 = vadd.f32 %v318, %v319
    %v321 = vrot.slane %v320, 2
    %v322 = vadd.f32 %v320, %v321
    %v323 = vrot.slane %v322, 1
    %v324 = vadd.f32 %v322, %v323
    %v325 = vld [vmem:[#allocation5] sm:$0xff]
    %v326 = vld [vmem:[#allocation5 + $0x8] sm:$0xff]
    %v327 = vld [vmem:[#allocation5 + $0x10] sm:$0xff]
    %v328 = vld [vmem:[#allocation5 + $0x18] sm:$0xff]
    %v329 = vld [vmem:[#allocation5 + $0x20] sm:$0xff]
    %v330 = vld [vmem:[#allocation5 + $0x28] sm:$0xff]
    %v331 = vld [vmem:[#allocation5 + $0x30] sm:$0xff]
    %v332 = vld [vmem:[#allocation5 + $0x38] sm:$0xff]
    %v333 = vld [vmem:[#allocation5 + $0x40] sm:$0xff]
    %v334 = vld [vmem:[#allocation5 + $0x48] sm:$0xff]
    %v335 = vld [vmem:[#allocation5 + $0x50] sm:$0xff]
    %v336 = vld [vmem:[#allocation5 + $0x58] sm:$0xff]
    %v337 = vld [vmem:[#allocation5 + $0x60] sm:$0xff]
    %v338 = vld [vmem:[#allocation5 + $0x68] sm:$0xff]
    %v339 = vld [vmem:[#allocation5 + $0x70] sm:$0xff]
    %v340 = vld [vmem:[#allocation5 + $0x78] sm:$0xff]
    %v341 = vld [vmem:[#allocation5 + $0x80] sm:$0xff]
    %v342 = vld [vmem:[#allocation5 + $0x88] sm:$0xff]
    %v343 = vld [vmem:[#allocation5 + $0x90] sm:$0xff]
    %v344 = vld [vmem:[#allocation5 + $0x98] sm:$0xff]
    %v345 = vld [vmem:[#allocation5 + $0xa0] sm:$0xff]
    %v346 = vld [vmem:[#allocation5 + $0xa8] sm:$0xff]
    %v347 = vld [vmem:[#allocation5 + $0xb0] sm:$0xff]
    %v348 = vld [vmem:[#allocation5 + $0xb8] sm:$0xff]
    %v349 = vld [vmem:[#allocation5 + $0xc0] sm:$0xff]
    %v350 = vld [vmem:[#allocation5 + $0xc8] sm:$0xff]
    %v351 = vld [vmem:[#allocation5 + $0xd0] sm:$0xff]
    %v352 = vld [vmem:[#allocation5 + $0xd8] sm:$0xff]
    %v353 = vld [vmem:[#allocation5 + $0xe0] sm:$0xff]
    %v354 = vld [vmem:[#allocation5 + $0xe8] sm:$0xff]
    %v355 = vld [vmem:[#allocation5 + $0xf0] sm:$0xff]
    %v356 = vld [vmem:[#allocation5 + $0xf8] sm:$0xff]
    %v357 = vld [vmem:[#allocation5 + $0x100] sm:$0xff]
    %v358 = vld [vmem:[#allocation5 + $0x108] sm:$0xff]
    %v359 = vld [vmem:[#allocation5 + $0x110] sm:$0xff]
    %v360 = vld [vmem:[#allocation5 + $0x118] sm:$0xff]
    %v361 = vld [vmem:[#allocation5 + $0x120] sm:$0xff]
    %v362 = vld [vmem:[#allocation5 + $0x128] sm:$0xff]
    %v363 = vld [vmem:[#allocation5 + $0x130] sm:$0xff]
    %v364 = vld [vmem:[#allocation5 + $0x138] sm:$0xff]
    %v365 = vld [vmem:[#allocation5 + $0x140] sm:$0xff]
    %v366 = vld [vmem:[#allocation5 + $0x148] sm:$0xff]
    %v367 = vld [vmem:[#allocation5 + $0x150] sm:$0xff]
    %v368 = vld [vmem:[#allocation5 + $0x158] sm:$0xff]
    %v369 = vld [vmem:[#allocation5 + $0x160] sm:$0xff]
    %v370 = vld [vmem:[#allocation5 + $0x168] sm:$0xff]
    %v371 = vld [vmem:[#allocation5 + $0x170] sm:$0xff]
    %v372 = vld [vmem:[#allocation5 + $0x178] sm:$0xff]
    %v373 = vld [vmem:[#allocation5 + $0x180] sm:$0xff]
    %v374 = vld [vmem:[#allocation5 + $0x188] sm:$0xff]
    %v375 = vld [vmem:[#allocation5 + $0x190] sm:$0xff]
    %v376 = vld [vmem:[#allocation5 + $0x198] sm:$0xff]
    %v377 = vld [vmem:[#allocation5 + $0x1a0] sm:$0xff]
    %v378 = vld [vmem:[#allocation5 + $0x1a8] sm:$0xff]
    %v379 = vld [vmem:[#allocation5 + $0x1b0] sm:$0xff]
    %v380 = vld [vmem:[#allocation5 + $0x1b8] sm:$0xff]
    %v381 = vld [vmem:[#allocation5 + $0x1c0] sm:$0xff]
    %v382 = vld [vmem:[#allocation5 + $0x1c8] sm:$0xff]
    %v383 = vld [vmem:[#allocation5 + $0x1d0] sm:$0xff]
    %v384 = vld [vmem:[#allocation5 + $0x1d8] sm:$0xff]
    %v385 = vld [vmem:[#allocation5 + $0x1e0] sm:$0xff]
    %v386 = vld [vmem:[#allocation5 + $0x1e8] sm:$0xff]
    %v387 = vld [vmem:[#allocation5 + $0x1f0] sm:$0xff]
    %v388 = vld [vmem:[#allocation5 + $0x1f8] sm:$0xff]
    %v389 = vadd.f32 %v325, %v327
    %v390 = vadd.f32 %v389, %v329
    %v391 = vadd.f32 %v390, %v331
    %v392 = vadd.f32 %v391, %v333
    %v393 = vadd.f32 %v392, %v335
    %v394 = vadd.f32 %v393, %v337
    %v395 = vadd.f32 %v394, %v339
    %v396 = vadd.f32 %v395, %v341
    %v397 = vadd.f32 %v396, %v343
    %v398 = vadd.f32 %v397, %v345
    %v399 = vadd.f32 %v398, %v347
    %v400 = vadd.f32 %v399, %v349
    %v401 = vadd.f32 %v400, %v351
    %v402 = vadd.f32 %v401, %v353
    %v403 = vadd.f32 %v402, %v355
    %v404 = vrot.slane %v403, 4
    %v405 = vadd.f32 %v403, %v404
    %v406 = vrot.slane %v405, 2
    %v407 = vadd.f32 %v405, %v406
    %v408 = vrot.slane %v407, 1
    %v409 = vadd.f32 %v407, %v408
    %v410 = vadd.f32 %v326, %v328
    %v411 = vadd.f32 %v410, %v330
    %v412 = vadd.f32 %v411, %v332
    %v413 = vadd.f32 %v412, %v334
    %v414 = vadd.f32 %v413, %v336
    %v415 = vadd.f32 %v414, %v338
    %v416 = vadd.f32 %v415, %v340
    %v417 = vadd.f32 %v416, %v342
    %v418 = vadd.f32 %v417, %v344
    %v419 = vadd.f32 %v418, %v346
    %v420 = vadd.f32 %v419, %v348
    %v421 = vadd.f32 %v420, %v350
    %v422 = vadd.f32 %v421, %v352
    %v423 = vadd.f32 %v422, %v354
    %v424 = vadd.f32 %v423, %v356
    %v425 = vrot.slane %v424, 4
    %v426 = vadd.f32 %v424, %v425
    %v427 = vrot.slane %v426, 2
    %v428 = vadd.f32 %v426, %v427
    %v429 = vrot.slane %v428, 1
    %v430 = vadd.f32 %v428, %v429
    %v431 = vadd.f32 %v357, %v359
    %v432 = vadd.f32 %v431, %v361
    %v433 = vadd.f32 %v432, %v363
    %v434 = vadd.f32 %v433, %v365
    %v435 = vadd.f32 %v434, %v367
    %v436 = vadd.f32 %v435, %v369
    %v437 = vadd.f32 %v436, %v371
    %v438 = vadd.f32 %v437, %v373
    %v439 = vadd.f32 %v438, %v375
    %v440 = vadd.f32 %v439, %v377
    %v441 = vadd.f32 %v440, %v379
    %v442 = vadd.f32 %v441, %v381
    %v443 = vadd.f32 %v442, %v383
    %v444 = vadd.f32 %v443, %v385
    %v445 = vadd.f32 %v444, %v387
    %v446 = vrot.slane %v445, 4
    %v447 = vadd.f32 %v445, %v446
    %v448 = vrot.slane %v447, 2
    %v449 = vadd.f32 %v447, %v448
    %v450 = vrot.slane %v449, 1
    %v451 = vadd.f32 %v449, %v450
    %v452 = vadd.f32 %v358, %v360
    %v453 = vadd.f32 %v452, %v362
    %v454 = vadd.f32 %v453, %v364
    %v455 = vadd.f32 %v454, %v366
    %v456 = vadd.f32 %v455, %v368
    %v457 = vadd.f32 %v456, %v370
    %v458 = vadd.f32 %v457, %v372
    %v459 = vadd.f32 %v458, %v374
    %v460 = vadd.f32 %v459, %v376
    %v461 = vadd.f32 %v460, %v378
    %v462 = vadd.f32 %v461, %v380
    %v463 = vadd.f32 %v462, %v382
    %v464 = vadd.f32 %v463, %v384
    %v465 = vadd.f32 %v464, %v386
    %v466 = vadd.f32 %v465, %v388
    %v467 = vrot.slane %v466, 4
    %v468 = vadd.f32 %v466, %v467
    %v469 = vrot.slane %v468, 2
    %v470 = vadd.f32 %v468, %v469
    %v471 = vrot.slane %v470, 1
    %v472 = vadd.f32 %v470, %v471
    %v473 = vadd.f32 %v261, %v409
    %v474 = vadd.f32 %v282, %v430
    %v475 = vadd.f32 %v303, %v451
    %v476 = vadd.f32 %v324, %v472
    %v477 = vld [vmem:[#allocation7] sm:$0xff]
    %v478 = vld [vmem:[#allocation7 + $0x8] sm:$0xff]
    %v479 = vld [vmem:[#allocation7 + $0x10] sm:$0xff]
    %v480 = vld [vmem:[#allocation7 + $0x18] sm:$0xff]
    %v481 = vld [vmem:[#allocation7 + $0x20] sm:$0xff]
    %v482 = vld [vmem:[#allocation7 + $0x28] sm:$0xff]
    %v483 = vld [vmem:[#allocation7 + $0x30] sm:$0xff]
    %v484 = vld [vmem:[#allocation7 + $0x38] sm:$0xff]
    %v485 = vld [vmem:[#allocation7 + $0x40] sm:$0xff]
    %v486 = vld [vmem:[#allocation7 + $0x48] sm:$0xff]
    %v487 = vld [vmem:[#allocation7 + $0x50] sm:$0xff]
    %v488 = vld [vmem:[#allocation7 + $0x58] sm:$0xff]
    %v489 = vld [vmem:[#allocation7 + $0x60] sm:$0xff]
    %v490 = vld [vmem:[#allocation7 + $0x68] sm:$0xff]
    %v491 = vld [vmem:[#allocation7 + $0x70] sm:$0xff]
    %v492 = vld [vmem:[#allocation7 + $0x78] sm:$0xff]
    %v493 = vld [vmem:[#allocation7 + $0x80] sm:$0xff]
    %v494 = vld [vmem:[#allocation7 + $0x88] sm:$0xff]
    %v495 = vld [vmem:[#allocation7 + $0x90] sm:$0xff]
    %v496 = vld [vmem:[#allocation7 + $0x98] sm:$0xff]
    %v497 = vld [vmem:[#allocation7 + $0xa0] sm:$0xff]
    %v498 = vld [vmem:[#allocation7 + $0xa8] sm:$0xff]
    %v499 = vld [vmem:[#allocation7 + $0xb0] sm:$0xff]
    %v500 = vld [vmem:[#allocation7 + $0xb8] sm:$0xff]
    %v501 = vld [vmem:[#allocation7 + $0xc0] sm:$0xff]
    %v502 = vld [vmem:[#allocation7 + $0xc8] sm:$0xff]
    %v503 = vld [vmem:[#allocation7 + $0xd0] sm:$0xff]
    %v504 = vld [vmem:[#allocation7 + $0xd8] sm:$0xff]
    %v505 = vld [vmem:[#allocation7 + $0xe0] sm:$0xff]
    %v506 = vld [vmem:[#allocation7 + $0xe8] sm:$0xff]
    %v507 = vld [vmem:[#allocation7 + $0xf0] sm:$0xff]
    %v508 = vld [vmem:[#allocation7 + $0xf8] sm:$0xff]
    %v509 = vld [vmem:[#allocation7 + $0x100] sm:$0xff]
    %v510 = vld [vmem:[#allocation7 + $0x108] sm:$0xff]
    %v511 = vld [vmem:[#allocation7 + $0x110] sm:$0xff]
    %v512 = vld [vmem:[#allocation7 + $0x118] sm:$0xff]
    %v513 = vld [vmem:[#allocation7 + $0x120] sm:$0xff]
    %v514 = vld [vmem:[#allocation7 + $0x128] sm:$0xff]
    %v515 = vld [vmem:[#allocation7 + $0x130] sm:$0xff]
    %v516 = vld [vmem:[#allocation7 + $0x138] sm:$0xff]
    %v517 = vld [vmem:[#allocation7 + $0x140] sm:$0xff]
    %v518 = vld [vmem:[#allocation7 + $0x148] sm:$0xff]
    %v519 = vld [vmem:[#allocation7 + $0x150] sm:$0xff]
    %v520 = vld [vmem:[#allocation7 + $0x158] sm:$0xff]
    %v521 = vld [vmem:[#allocation7 + $0x160] sm:$0xff]
    %v522 = vld [vmem:[#allocation7 + $0x168] sm:$0xff]
    %v523 = vld [vmem:[#allocation7 + $0x170] sm:$0xff]
    %v524 = vld [vmem:[#allocation7 + $0x178] sm:$0xff]
    %v525 = vld [vmem:[#allocation7 + $0x180] sm:$0xff]
    %v526 = vld [vmem:[#allocation7 + $0x188] sm:$0xff]
    %v527 = vld [vmem:[#allocation7 + $0x190] sm:$0xff]
    %v528 = vld [vmem:[#allocation7 + $0x198] sm:$0xff]
    %v529 = vld [vmem:[#allocation7 + $0x1a0] sm:$0xff]
    %v530 = vld [vmem:[#allocation7 + $0x1a8] sm:$0xff]
    %v531 = vld [vmem:[#allocation7 + $0x1b0] sm:$0xff]
    %v532 = vld [vmem:[#allocation7 + $0x1b8] sm:$0xff]
    %v533 = vld [vmem:[#allocation7 + $0x1c0] sm:$0xff]
    %v534 = vld [vmem:[#allocation7 + $0x1c8] sm:$0xff]
    %v535 = vld [vmem:[#allocation7 + $0x1d0] sm:$0xff]
    %v536 = vld [vmem:[#allocation7 + $0x1d8] sm:$0xff]
    %v537 = vld [vmem:[#allocation7 + $0x1e0] sm:$0xff]
    %v538 = vld [vmem:[#allocation7 + $0x1e8] sm:$0xff]
    %v539 = vld [vmem:[#allocation7 + $0x1f0] sm:$0xff]
    %v540 = vld [vmem:[#allocation7 + $0x1f8] sm:$0xff]
    %v541 = vadd.f32 %v477, %v479
    %v542 = vadd.f32 %v541, %v481
    %v543 = vadd.f32 %v542, %v483
    %v544 = vadd.f32 %v543, %v485
    %v545 = vadd.f32 %v544, %v487
    %v546 = vadd.f32 %v545, %v489
    %v547 = vadd.f32 %v546, %v491
    %v548 = vadd.f32 %v547, %v493
    %v549 = vadd.f32 %v548, %v495
    %v550 = vadd.f32 %v549, %v497
    %v551 = vadd.f32 %v550, %v499
    %v552 = vadd.f32 %v551, %v501
    %v553 = vadd.f32 %v552, %v503
    %v554 = vadd.f32 %v553, %v505
    %v555 = vadd.f32 %v554, %v507
    %v556 = vrot.slane %v555, 4
    %v557 = vadd.f32 %v555, %v556
    %v558 = vrot.slane %v557, 2
    %v559 = vadd.f32 %v557, %v558
    %v560 = vrot.slane %v559, 1
    %v561 = vadd.f32 %v559, %v560
    %v562 = vadd.f32 %v478, %v480
    %v563 = vadd.f32 %v562, %v482
    %v564 = vadd.f32 %v563, %v484
    %v565 = vadd.f32 %v564, %v486
    %v566 = vadd.f32 %v565, %v488
    %v567 = vadd.f32 %v566, %v490
    %v568 = vadd.f32 %v567, %v492
    %v569 = vadd.f32 %v568, %v494
    %v570 = vadd.f32 %v569, %v496
    %v571 = vadd.f32 %v570, %v498
    %v572 = vadd.f32 %v571, %v500
    %v573 = vadd.f32 %v572, %v502
    %v574 = vadd.f32 %v573, %v504
    %v575 = vadd.f32 %v574, %v506
    %v576 = vadd.f32 %v575, %v508
    %v577 = vrot.slane %v576, 4
    %v578 = vadd.f32 %v576, %v577
    %v579 = vrot.slane %v578, 2
    %v580 = vadd.f32 %v578, %v579
    %v581 = vrot.slane %v580, 1
    %v582 = vadd.f32 %v580, %v581
    %v583 = vadd.f32 %v509, %v511
    %v584 = vadd.f32 %v583, %v513
    %v585 = vadd.f32 %v584, %v515
    %v586 = vadd.f32 %v585, %v517
    %v587 = vadd.f32 %v586, %v519
    %v588 = vadd.f32 %v587, %v521
    %v589 = vadd.f32 %v588, %v523
    %v590 = vadd.f32 %v589, %v525
    %v591 = vadd.f32 %v590, %v527
    %v592 = vadd.f32 %v591, %v529
    %v593 = vadd.f32 %v592, %v531
    %v594 = vadd.f32 %v593, %v533
    %v595 = vadd.f32 %v594, %v535
    %v596 = vadd.f32 %v595, %v537
    %v597 = vadd.f32 %v596, %v539
    %v598 = vrot.slane %v597, 4
    %v599 = vadd.f32 %v597, %v598
    %v600 = vrot.slane %v599, 2
    %v601 = vadd.f32 %v599, %v600
    %v602 = vrot.slane %v601, 1
    %v603 = vadd.f32 %v601, %v602
    %v604 = vadd.f32 %v510, %v512
    %v605 = vadd.f32 %v604, %v514
    %v606 = vadd.f32 %v605, %v516
    %v607 = vadd.f32 %v606, %v518
    %v608 = vadd.f32 %v607, %v520
    %v609 = vadd.f32 %v608, %v522
    %v610 = vadd.f32 %v609, %v524
    %v611 = vadd.f32 %v610, %v526
    %v612 = vadd.f32 %v611, %v528
    %v613 = vadd.f32 %v612, %v530
    %v614 = vadd.f32 %v613, %v532
    %v615 = vadd.f32 %v614, %v534
    %v616 = vadd.f32 %v615, %v536
    %v617 = vadd.f32 %v616, %v538
    %v618 = vadd.f32 %v617, %v540
    %v619 = vrot.slane %v618, 4
    %v620 = vadd.f32 %v618, %v619
    %v621 = vrot.slane %v620, 2
    %v622 = vadd.f32 %v620, %v621
    %v623 = vrot.slane %v622, 1
    %v624 = vadd.f32 %v622, %v623
    %v625 = vadd.f32 %v473, %v561
    %v626 = vadd.f32 %v474, %v582
    %v627 = vadd.f32 %v475, %v603
    %v628 = vadd.f32 %v476, %v624
    %v629 = vld [vmem:[#allocation8] sm:$0xff]
    %v630 = vld [vmem:[#allocation8 + $0x8] sm:$0xff]
    %v631 = vld [vmem:[#allocation8 + $0x10] sm:$0xff]
    %v632 = vld [vmem:[#allocation8 + $0x18] sm:$0xff]
    %v633 = vld [vmem:[#allocation8 + $0x20] sm:$0xff]
    %v634 = vld [vmem:[#allocation8 + $0x28] sm:$0xff]
    %v635 = vld [vmem:[#allocation8 + $0x30] sm:$0xff]
    %v636 = vld [vmem:[#allocation8 + $0x38] sm:$0xff]
    %v637 = vld [vmem:[#allocation8 + $0x40] sm:$0xff]
    %v638 = vld [vmem:[#allocation8 + $0x48] sm:$0xff]
    %v639 = vld [vmem:[#allocation8 + $0x50] sm:$0xff]
    %v640 = vld [vmem:[#allocation8 + $0x58] sm:$0xff]
    %v641 = vld [vmem:[#allocation8 + $0x60] sm:$0xff]
    %v642 = vld [vmem:[#allocation8 + $0x68] sm:$0xff]
    %v643 = vld [vmem:[#allocation8 + $0x70] sm:$0xff]
    %v644 = vld [vmem:[#allocation8 + $0x78] sm:$0xff]
    %v645 = vld [vmem:[#allocation8 + $0x80] sm:$0xff]
    %v646 = vld [vmem:[#allocation8 + $0x88] sm:$0xff]
    %v647 = vld [vmem:[#allocation8 + $0x90] sm:$0xff]
    %v648 = vld [vmem:[#allocation8 + $0x98] sm:$0xff]
    %v649 = vld [vmem:[#allocation8 + $0xa0] sm:$0xff]
    %v650 = vld [vmem:[#allocation8 + $0xa8] sm:$0xff]
    %v651 = vld [vmem:[#allocation8 + $0xb0] sm:$0xff]
    %v652 = vld [vmem:[#allocation8 + $0xb8] sm:$0xff]
    %v653 = vld [vmem:[#allocation8 + $0xc0] sm:$0xff]
    %v654 = vld [vmem:[#allocation8 + $0xc8] sm:$0xff]
    %v655 = vld [vmem:[#allocation8 + $0xd0] sm:$0xff]
    %v656 = vld [vmem:[#allocation8 + $0xd8] sm:$0xff]
    %v657 = vld [vmem:[#allocation8 + $0xe0] sm:$0xff]
    %v658 = vld [vmem:[#allocation8 + $0xe8] sm:$0xff]
    %v659 = vld [vmem:[#allocation8 + $0xf0] sm:$0xff]
    %v660 = vld [vmem:[#allocation8 + $0xf8] sm:$0xff]
    %v661 = vld [vmem:[#allocation8 + $0x100] sm:$0xff]
    %v662 = vld [vmem:[#allocation8 + $0x108] sm:$0xff]
    %v663 = vld [vmem:[#allocation8 + $0x110] sm:$0xff]
    %v664 = vld [vmem:[#allocation8 + $0x118] sm:$0xff]
    %v665 = vld [vmem:[#allocation8 + $0x120] sm:$0xff]
    %v666 = vld [vmem:[#allocation8 + $0x128] sm:$0xff]
    %v667 = vld [vmem:[#allocation8 + $0x130] sm:$0xff]
    %v668 = vld [vmem:[#allocation8 + $0x138] sm:$0xff]
    %v669 = vld [vmem:[#allocation8 + $0x140] sm:$0xff]
    %v670 = vld [vmem:[#allocation8 + $0x148] sm:$0xff]
    %v671 = vld [vmem:[#allocation8 + $0x150] sm:$0xff]
    %v672 = vld [vmem:[#allocation8 + $0x158] sm:$0xff]
    %v673 = vld [vmem:[#allocation8 + $0x160] sm:$0xff]
    %v674 = vld [vmem:[#allocation8 + $0x168] sm:$0xff]
    %v675 = vld [vmem:[#allocation8 + $0x170] sm:$0xff]
    %v676 = vld [vmem:[#allocation8 + $0x178] sm:$0xff]
    %v677 = vld [vmem:[#allocation8 + $0x180] sm:$0xff]
    %v678 = vld [vmem:[#allocation8 + $0x188] sm:$0xff]
    %v679 = vld [vmem:[#allocation8 + $0x190] sm:$0xff]
    %v680 = vld [vmem:[#allocation8 + $0x198] sm:$0xff]
    %v681 = vld [vmem:[#allocation8 + $0x1a0] sm:$0xff]
    %v682 = vld [vmem:[#allocation8 + $0x1a8] sm:$0xff]
    %v683 = vld [vmem:[#allocation8 + $0x1b0] sm:$0xff]
    %v684 = vld [vmem:[#allocation8 + $0x1b8] sm:$0xff]
    %v685 = vld [vmem:[#allocation8 + $0x1c0] sm:$0xff]
    %v686 = vld [vmem:[#allocation8 + $0x1c8] sm:$0xff]
    %v687 = vld [vmem:[#allocation8 + $0x1d0] sm:$0xff]
    %v688 = vld [vmem:[#allocation8 + $0x1d8] sm:$0xff]
    %v689 = vld [vmem:[#allocation8 + $0x1e0] sm:$0xff]
    %v690 = vld [vmem:[#allocation8 + $0x1e8] sm:$0xff]
    %v691 = vld [vmem:[#allocation8 + $0x1f0] sm:$0xff]
    %v692 = vld [vmem:[#allocation8 + $0x1f8] sm:$0xff]
    %v693 = vadd.f32 %v629, %v631
    %v694 = vadd.f32 %v693, %v633
    %v695 = vadd.f32 %v694, %v635
    %v696 = vadd.f32 %v695, %v637
    %v697 = vadd.f32 %v696, %v639
    %v698 = vadd.f32 %v697, %v641
    %v699 = vadd.f32 %v698, %v643
    %v700 = vadd.f32 %v699, %v645
    %v701 = vadd.f32 %v700, %v647
    %v702 = vadd.f32 %v701, %v649
    %v703 = vadd.f32 %v702, %v651
    %v704 = vadd.f32 %v703, %v653
    %v705 = vadd.f32 %v704, %v655
    %v706 = vadd.f32 %v705, %v657
    %v707 = vadd.f32 %v706, %v659
    %v708 = vrot.slane %v707, 4
    %v709 = vadd.f32 %v707, %v708
    %v710 = vrot.slane %v709, 2
    %v711 = vadd.f32 %v709, %v710
    %v712 = vrot.slane %v711, 1
    %v713 = vadd.f32 %v711, %v712
    %v714 = vadd.f32 %v630, %v632
    %v715 = vadd.f32 %v714, %v634
    %v716 = vadd.f32 %v715, %v636
    %v717 = vadd.f32 %v716, %v638
    %v718 = vadd.f32 %v717, %v640
    %v719 = vadd.f32 %v718, %v642
    %v720 = vadd.f32 %v719, %v644
    %v721 = vadd.f32 %v720, %v646
    %v722 = vadd.f32 %v721, %v648
    %v723 = vadd.f32 %v722, %v650
    %v724 = vadd.f32 %v723, %v652
    %v725 = vadd.f32 %v724, %v654
    %v726 = vadd.f32 %v725, %v656
    %v727 = vadd.f32 %v726, %v658
    %v728 = vadd.f32 %v727, %v660
    %v729 = vrot.slane %v728, 4
    %v730 = vadd.f32 %v728, %v729
    %v731 = vrot.slane %v730, 2
    %v732 = vadd.f32 %v730, %v731
    %v733 = vrot.slane %v732, 1
    %v734 = vadd.f32 %v732, %v733
    %v735 = vadd.f32 %v661, %v663
    %v736 = vadd.f32 %v735, %v665
    %v737 = vadd.f32 %v736, %v667
    %v738 = vadd.f32 %v737, %v669
    %v739 = vadd.f32 %v738, %v671
    %v740 = vadd.f32 %v739, %v673
    %v741 = vadd.f32 %v740, %v675
    %v742 = vadd.f32 %v741, %v677
    %v743 = vadd.f32 %v742, %v679
    %v744 = vadd.f32 %v743, %v681
    %v745 = vadd.f32 %v744, %v683
    %v746 = vadd.f32 %v745, %v685
    %v747 = vadd.f32 %v746, %v687
    %v748 = vadd.f32 %v747, %v689
    %v749 = vadd.f32 %v748, %v691
    %v750 = vrot.slane %v749, 4
    %v751 = vadd.f32 %v749, %v750
    %v752 = vrot.slane %v751, 2
    %v753 = vadd.f32 %v751, %v752
    %v754 = vrot.slane %v753, 1
    %v755 = vadd.f32 %v753, %v754
    %v756 = vadd.f32 %v662, %v664
    %v757 = vadd.f32 %v756, %v666
    %v758 = vadd.f32 %v757, %v668
    %v759 = vadd.f32 %v758, %v670
    %v760 = vadd.f32 %v759, %v672
    %v761 = vadd.f32 %v760, %v674
    %v762 = vadd.f32 %v761, %v676
    %v763 = vadd.f32 %v762, %v678
    %v764 = vadd.f32 %v763, %v680
    %v765 = vadd.f32 %v764, %v682
    %v766 = vadd.f32 %v765, %v684
    %v767 = vadd.f32 %v766, %v686
    %v768 = vadd.f32 %v767, %v688
    %v769 = vadd.f32 %v768, %v690
    %v770 = vadd.f32 %v769, %v692
    %v771 = vrot.slane %v770, 4
    %v772 = vadd.f32 %v770, %v771
    %v773 = vrot.slane %v772, 2
    %v774 = vadd.f32 %v772, %v773
    %v775 = vrot.slane %v774, 1
    %v776 = vadd.f32 %v774, %v775
    %v777 = vadd.f32 %v625, %v713
    %v778 = vadd.f32 %v626, %v734
    %v779 = vadd.f32 %v627, %v755
    %v780 = vadd.f32 %v628, %v776
    %v785 = vcombine.low %v777, %v778
    %v787 = vunpack.c.l.s4 1983009808
    %v788 = vunpack.c.0.s8 %v787
    %v789 = vlaneseq
    %v790 = vshrl.u32 %v789, 7
    %v791 = vsub.s32 %v788, %v790
    %v792 = vrot.slane %v785, %v791
    %v793 = vcombine.low %v779, %v780
    %v795 = vunpack.c.l.s4 1983009808
    %v796 = vunpack.c.0.s8 %v795
    %v797 = vlaneseq
    %v798 = vshrl.u32 %v797, 7
    %v799 = vsub.s32 %v796, %v798
    %v800 = vrot.slane %v793, %v799
    %vm801 = vcmask 1044484
    %v802 = vsel %vm801, %v792, %v792
    %vm803 = vcmask 1046534
    %v804 = vsel %vm803, %v792, %v802
    %v805 = vrot.slane %v800, 7
    %vm806 = vcmask 1041409
    %v807 = vsel %vm806, %v805, %v804
    %vm808 = vcmask 1043459
    %v809 = vsel %vm808, %v805, %v807
    %vm810 = vcmask 1045509
    %v811 = vsel %vm810, %v805, %v809
    %vm812 = vcmask 1047559
    %v813 = vsel %vm812, %v805, %v811
    %815 = vst [vmem:[#allocation10] sm:$0xf] %v813
    // Predicated region
    $region34: #{tpu_custom_call.1} parent=1 // pred_check
      _
    $region35: #{tpu_custom_call.1} parent=1 // pred_check_branch
      %817 = sbr.rel (0) target = $region37
    $region36: #{tpu_custom_call.1} parent=1 // pred_region
      %s819 = ssub.s32 64, 64
      %820 = vsyncadd [#allocation4], %s819
      %s822 = sshll.u32 [#allocation10], 4
      %s823 = int_to_ptr.vmem [resolvable:$true] %s822
      %825 = dma.vmem_to_hbm [thread:$0]  %s823, 64, %s4, [#allocation4]
    $region37: #{tpu_custom_call.1} parent=1 // pred_fallthru
      _
    // Predicated region
    $region38: #{tpu_custom_call.1} parent=1 // pred_check
      _
    $region39: #{tpu_custom_call.1} parent=1 // pred_check_branch
      %827 = sbr.rel (0) target = $region41
    $region40: #{tpu_custom_call.1} parent=1 // pred_region
      %828 = dma.done [#allocation4], 64
    $region41: #{tpu_custom_call.1} parent=1 // pred_fallthru
      _
    %829 = vsyncpa [#allocation3], 1
    %830 = vsyncpa [#allocation6], 1
    %831 = vsyncpa [#allocation9], 1
    %832 = vsyncpa [#allocation4], 1

</llo_original>
